<compile_context>
chip_gen: v7x
topology: tpu7x:2x2x1
jax: 0.10.0
libtpu: 0.0.40
codegen_flags: <defaults>
</compile_context>

<pallas_src>
import functools

import jax
import jax.numpy as jnp
from jax.experimental import pallas as pl
from jax.experimental.pallas import tpu as pltpu


# ----------------------------------------------------------------------------
# Pallas kernel: NormalizationLayer
#   out = alpha * (x - mean) / (std + eps) + bias
# mean/std over the last axis; std is unbiased (N-1), matching torch.std.
# ----------------------------------------------------------------------------
def _norm_kernel(x_ref, alpha_ref, bias_ref, o_ref, *, eps, d_model):
    x = x_ref[...].astype(jnp.float32)                  # (row_tile, d_model)
    n = jnp.float32(d_model)
    mean = jnp.sum(x, axis=-1, keepdims=True) * (1.0 / n)      # (row_tile, 1)
    centered = x - mean
    # Two-pass unbiased variance: numerically robust even when |mean| >> std.
    denom = jnp.float32(max(d_model - 1, 1))
    var = jnp.sum(centered * centered, axis=-1, keepdims=True) * (1.0 / denom)
    std = jnp.sqrt(var)

    alpha = alpha_ref[0, 0]
    bias = bias_ref[0, 0]
    # Fold scalars into a per-row scale; epilogue is 2 VALU ops per element.
    scale = alpha / (std + eps)                                  # exact divide
    o_ref[...] = (centered * scale + bias).astype(o_ref.dtype)


def _pick_row_tile(rows, d_model, itemsize):
    """Largest row tile that keeps all VMEM users under a conservative budget."""
    # Sublane packing granularity for the second-to-last block dim.
    if itemsize >= 4:
        gran = 8
    elif itemsize == 2:
        gran = 16
    else:
        gran = 32
    # Per row of tile:
    #   in + out tiles, each double-buffered           -> 4 * d_model * itemsize
    #   in-kernel f32 working copies (x_f32, centered) -> 2 * d_model * 4
    per_row = 4 * d_model * itemsize + 2 * d_model * 4
    # Conservative budget: safe on v7x (64 MiB physical VMEM, 40 MiB scoped
    # limit requested below) and leaves plenty of headroom on v5e/v6e (128 MiB).
    budget_bytes = 20 << 20
    max_rows = max(gran, (budget_bytes // per_row) // gran * gran)
    # TODO(synk): for extreme d_model (gran rows already over budget) a second
    # grid axis over d_model chunks with a small per-row accumulator is needed;
    # here we just clamp to the granularity floor.
    tile = min(1024, max_rows)
    # Keep at least ~4 grid steps so both v7x TensorCores get work and the
    # input/output DMA pipeline stays warm (no-op for single-core chips and
    # for problems that already need many steps).
    per_step = -(-rows // 4)                # ceil(rows / 4)
    per_step = -(-per_step // gran) * gran  # round up to granularity
    tile = min(tile, max(gran, per_step))
    tile = max(gran, (tile // gran) * gran)
    return tile


def normalization_layer(x, alpha, bias, *, eps=1e-6, row_tile=None):
    """Applies the NormalizationLayer over the last axis of x.

    x:     (..., d_model) float array
    alpha: scalar / (1,) float array (scale parameter)
    bias:  scalar / (1,) float array (shift parameter)

    The last BlockSpec dim is the full d_model, so any d_model is legal; for
    peak bandwidth real workloads should have d_model % 128 == 0 (lane-dense
    loads/stores).
    """
    orig_shape = x.shape
    d_model = orig_shape[-1]
    rows = 1
    for s in orig_shape[:-1]:
        rows *= s
    x2 = x.reshape(rows, d_model)

    # Scalar params as (1, 1) VMEM tiles -> plain, well-tested broadcast path.
    alpha2 = jnp.asarray(alpha, dtype=jnp.float32).reshape(1, 1)
    bias2 = jnp.asarray(bias, dtype=jnp.float32).reshape(1, 1)

    itemsize = jnp.dtype(x.dtype).itemsize
    if row_tile is None:
        row_tile = _pick_row_tile(rows, d_model, itemsize)

    # Ragged last block is handled by Pallas partial-block write masking; each
    # row's reduction stays inside its own row, so the undefined padding rows
    # of the input block can never leak into valid output rows.
    grid = (pl.cdiv(rows, row_tile),)

    out = pl.pallas_call(
        functools.partial(_norm_kernel, eps=float(eps), d_model=d_model),
        out_shape=jax.ShapeDtypeStruct((rows, d_model), x.dtype),
        grid=grid,
        in_specs=[
            pl.BlockSpec((row_tile, d_model), lambda i: (i, 0)),
            pl.BlockSpec((1, 1), lambda i: (0, 0)),   # alpha (scalar param)
            pl.BlockSpec((1, 1), lambda i: (0, 0)),   # bias  (scalar param)
        ],
        out_specs=pl.BlockSpec((row_tile, d_model), lambda i: (i, 0)),
        compiler_params=pltpu.CompilerParams(
            dimension_semantics=("parallel",),   # shards rows across TCs (v7x)
            vmem_limit_bytes=40 << 20,           # big tiles, safe on v7x 64 MiB
        ),
    )(x2, alpha2, bias2)

    return out.reshape(orig_shape)


# ----------------------------------------------------------------------------
# Decoder wrapper (mirrors the PyTorch Decoder.forward)
# ----------------------------------------------------------------------------
class Decoder:
    def __init__(self, layers=(), eps=1e-6):
        # `layers`: sequence of callables (x, enc_out, src_mask, tgt_mask) -> x
        self.layers = tuple(layers)
        self.eps = eps
        # NormalizationLayer parameters: Alpha = ones(1), Bias = ones(1)
        self.alpha = jnp.ones((1,), dtype=jnp.float32)
        self.bias = jnp.ones((1,), dtype=jnp.float32)

    def __call__(self, x, encoder_output, source_mask, target_mask):
        for layer in self.layers:
            x = layer(x, encoder_output, source_mask, target_mask)
        return normalization_layer(x, self.alpha, self.bias, eps=self.eps)


# ----------------------------------------------------------------------------
# Demo / self-test
# ----------------------------------------------------------------------------
def _reference(x, eps=1e-6):
    mean = jnp.mean(x, axis=-1, keepdims=True)
    std = jnp.std(x, axis=-1, keepdims=True, ddof=1)   # unbiased, like torch
    return 1.0 * (x - mean) / (std + eps) + 1.0


if __name__ == "__main__":
    key = jax.random.PRNGKey(0)

    # Case 1: rows an exact multiple of the chosen tile (batch*seq = 16).
    # Case 2: ragged rows (batch*seq = 20) to exercise the partial last block.
    cases = [
        (2, 8, 256),   # lane-dense d_model (multiple of 128)
        (2, 10, 256),
    ]

    decoder = Decoder(layers=())  # TODO(synk): plug in real decoder blocks

    for batch, seq, d_model in cases:
        key, k_x, k_enc = jax.random.split(key, 3)
        x = jax.random.normal(k_x, (batch, seq, d_model), dtype=jnp.float32)
        encoder_output = jax.random.normal(k_enc, (batch, seq, d_model),
                                           dtype=jnp.float32)
        source_mask = jnp.ones((batch, 1, 1, seq), dtype=jnp.float32)
        target_mask = jnp.ones((batch, 1, seq, seq), dtype=jnp.float32)

        out = decoder(x, encoder_output, source_mask, target_mask)
        out = jax.block_until_ready(out)

        ref = _reference(x)
        assert out.shape == (batch, seq, d_model)
        assert jnp.allclose(out, ref, atol=5e-4, rtol=5e-4), \
            f"mismatch vs reference at shape {(batch, seq, d_model)}"

    print("KERNEL_OK")
</pallas_src>

<mosaic_0001>
module attributes {stable_mosaic.version = 11 : i64} {
  func.func @_norm_kernel(%arg0: i32, %arg1: memref<8x256xf32, #tpu.memory_space<vmem>>, %arg2: memref<1x1xf32, #tpu.memory_space<vmem>>, %arg3: memref<1x1xf32, #tpu.memory_space<vmem>>, %arg4: memref<8x256xf32, #tpu.memory_space<vmem>>) attributes {dimension_semantics = [#tpu.dimension_semantics<parallel>], iteration_bounds = array<i64: 2>, scalar_prefetch = 0 : i64, scratch_operands = 0 : i64, tpu.core_type = #tpu.core_type<tc>, window_params = [{transform_indices = @transform_0, window_bounds = array<i64: 8, 256>}, {pipeline_mode = #tpu.pipeline_mode<synchronous>, transform_indices = @transform_1, window_bounds = array<i64: 1, 1>}, {pipeline_mode = #tpu.pipeline_mode<synchronous>, transform_indices = @transform_2, window_bounds = array<i64: 1, 1>}, {transform_indices = @transform_3, window_bounds = array<i64: 8, 256>}]} {
    %c0 = arith.constant 0 : index
    %c0_0 = arith.constant 0 : index
    %0 = vector.load %arg1[%c0, %c0_0] : memref<8x256xf32, #tpu.memory_space<vmem>>, vector<8x256xf32>
    %cst = arith.constant dense<0.000000e+00> : vector<8xf32>
    %1 = vector.multi_reduction <add>, %0, %cst [1] : vector<8x256xf32> to vector<8xf32>
    %2 = vector.shape_cast %1 : vector<8xf32> to vector<8x1xf32>
    %cst_1 = arith.constant 1.000000e+00 : f32
    %cst_2 = arith.constant 2.560000e+02 : f32
    %3 = arith.divf %cst_1, %cst_2 : f32
    %4 = vector.broadcast %3 : f32 to vector<8x1xf32>
    %5 = arith.mulf %2, %4 : vector<8x1xf32>
    %6 = vector.broadcast %5 : vector<8x1xf32> to vector<8x256xf32>
    %7 = arith.subf %0, %6 : vector<8x256xf32>
    %8 = arith.mulf %7, %7 : vector<8x256xf32>
    %cst_3 = arith.constant dense<0.000000e+00> : vector<8xf32>
    %9 = vector.multi_reduction <add>, %8, %cst_3 [1] : vector<8x256xf32> to vector<8xf32>
    %10 = vector.shape_cast %9 : vector<8xf32> to vector<8x1xf32>
    %cst_4 = arith.constant 1.000000e+00 : f32
    %cst_5 = arith.constant 2.550000e+02 : f32
    %11 = arith.divf %cst_4, %cst_5 : f32
    %12 = vector.broadcast %11 : f32 to vector<8x1xf32>
    %13 = arith.mulf %10, %12 : vector<8x1xf32>
    %14 = math.sqrt %13 : vector<8x1xf32>
    %c0_6 = arith.constant 0 : index
    %c0_7 = arith.constant 0 : index
    %15 = vector.load %arg2[%c0_6, %c0_7] : memref<1x1xf32, #tpu.memory_space<vmem>>, vector<1x1xf32>
    %16 = vector.extract %15[0, 0] : f32 from vector<1x1xf32>
    %c0_8 = arith.constant 0 : index
    %c0_9 = arith.constant 0 : index
    %17 = vector.load %arg3[%c0_8, %c0_9] : memref<1x1xf32, #tpu.memory_space<vmem>>, vector<1x1xf32>
    %18 = vector.extract %17[0, 0] : f32 from vector<1x1xf32>
    %cst_10 = arith.constant 9.99999997E-7 : f32
    %19 = vector.broadcast %cst_10 : f32 to vector<8x1xf32>
    %20 = arith.addf %14, %19 : vector<8x1xf32>
    %21 = vector.broadcast %16 : f32 to vector<8x1xf32>
    %22 = arith.divf %21, %20 : vector<8x1xf32>
    %23 = vector.broadcast %22 : vector<8x1xf32> to vector<8x256xf32>
    %24 = arith.mulf %7, %23 : vector<8x256xf32>
    %25 = vector.broadcast %18 : f32 to vector<8x256xf32>
    %26 = arith.addf %24, %25 : vector<8x256xf32>
    %c0_11 = arith.constant 0 : index
    %c0_12 = arith.constant 0 : index
    %27 = vector.load %arg4[%c0_11, %c0_12] : memref<8x256xf32, #tpu.memory_space<vmem>>, vector<8x256xf32>
    tpu.vector_store %arg4[%c0_11, %c0_12], %26 {strides = array<i32>} : memref<8x256xf32, #tpu.memory_space<vmem>>, vector<8x256xf32>,
    return
  }
  func.func @transform_0(%arg0: i32) -> (i32, i32) {
    %c0_i32 = arith.constant 0 : i32
    %c0_i32_0 = arith.constant 0 : i32
    return %arg0, %c0_i32 : i32, i32
  }
  func.func @transform_1(%arg0: i32) -> (i32, i32) {
    %c0_i32 = arith.constant 0 : i32
    %c0_i32_0 = arith.constant 0 : i32
    %c0_i32_1 = arith.constant 0 : i32
    return %c0_i32, %c0_i32_0 : i32, i32
  }
  func.func @transform_2(%arg0: i32) -> (i32, i32) {
    %c0_i32 = arith.constant 0 : i32
    %c0_i32_0 = arith.constant 0 : i32
    %c0_i32_1 = arith.constant 0 : i32
    return %c0_i32, %c0_i32_0 : i32, i32
  }
  func.func @transform_3(%arg0: i32) -> (i32, i32) {
    %c0_i32 = arith.constant 0 : i32
    %c0_i32_0 = arith.constant 0 : i32
    return %arg0, %c0_i32 : i32, i32
  }
}

</mosaic_0001>

<llo_original>
// kernel: tpu_custom_call.1
$region0: #{tpu_custom_call.1}
  #allocation0 [shape = 'u32[]', space=smem, size = 0x4, offset = 0x4, fixed_abs, tag = 'smem constant byte address 0x4 - core index']
  #allocation1 [shape = 'u32[144,128]{1,0:T(1,128)}', space=vmem, size = 0x12000, scoped, tag = 'internal scratch']
  #allocation2 [shape = 'f32[1,1]{1,0:T(1,128)S(1)}', space=vmem, size = 0x200, scoped, tag = 'scoped memory for tpu_custom_call.1']
  #allocation3 [shape = 'f32[1,1]{1,0:T(1,128)S(1)}', space=vmem, size = 0x200, scoped, tag = 'scoped memory for tpu_custom_call.1']
  %s0 = inlined_call_operand.hbm [shape: f32[16,256], index: 0, kind: input, shape index: {}]
  %s1 = inlined_call_operand.<no memory space> [shape: f32[1,1], index: 1, kind: input, shape index: {}]
  %s2 = inlined_call_operand.<no memory space> [shape: f32[1,1], index: 2, kind: input, shape index: {}]
  %s3 = inlined_call_operand.hbm [shape: f32[16,256], index: 3, kind: output, shape index: {}]
  %s4 = sld [smem:[#allocation0]]
  $region49: #{tpu_custom_call.1} parent=0
    _
  %s6 = ssub.s32 1, %s4
  %s7 = scalar_select 0, %s6, %s4
  %v8 = vstv %s1
  %9 = vst [vmem:[#allocation2] sm:$0x1] %v8
  %v10 = vstv %s2
  %11 = vst [vmem:[#allocation3] sm:$0x1] %v10
  $region1: #{tpu_custom_call.1} parent=0
    #allocation4 [shape = 'u8[16384]{0}', space=vmem, size = 0x4000, scoped, tag = 'input window, operand 0']
    #allocation5 [shape = 's32[2]{0}', space=sflag, size = 0x8, scoped, tag = 'scoped memory for tpu_custom_call.1']
    #allocation6 [shape = 's32[2]{0}', space=sflag, size = 0x8, scoped, tag = 'scoped memory for tpu_custom_call.1']
    #allocation7 [shape = 'u8[16384]{0}', space=vmem, size = 0x4000, scoped, tag = 'output window, operand 0']
    %12 = vsyncpa [#allocation5], 0
    %s13 = scalar_lea.sflag [#allocation5], 1
    %14 = vsyncpa %s13, 0
    %15 = vsyncpa [#allocation6], 0
    %s16 = scalar_lea.sflag [#allocation6], 1
    %17 = vsyncpa %s16, 0
    loop: start=0, step=1, limit=4
    $region2: #{tpu_custom_call.1} parent=1 // loop_pre_header
      _
    $region3: #{tpu_custom_call.1} parent=1 // loop_header
      %s19 = sphi 0, %s23
      %p20 = scmp.ge.s32.totalorder %s19, 4
      %s29 = sphi 0, %s31
      %s32 = sphi 0, %s29
      %s33 = sphi 0, %s32
      %s49 = sphi 0, %s33
      %s53 = sphi 0, %s53
      %s55 = sphi 0, %s53
      %s56 = sphi 0, %s55
      %s70 = sphi 0, %s56
      %s74 = sphi 0, %s74
      %s76 = sphi 0, %s74
      %s77 = sphi 0, %s76
      %s91 = sphi 0, %s77
      %s97 = sphi 0, %s99
      %s100 = sphi 0, %s97
      %s101 = sphi 0, %s100
      %s117 = sphi 0, %s101
    $region4: #{tpu_custom_call.1} parent=1 // loop_header_branch
      %22 = sbr.rel (%p20) target = $region8
    $region5: #{tpu_custom_call.1} parent=1 // loop_body
      %s24 = ssub.s32 %s19, 1
      %s25 = ssub.s32 %s19, 2
      %s26 = sadd.s32 %s19, 1
      %s27 = ssub.s32 %s19, %s26
      %p28 = scmp.eq.s32.totalorder %s27, 0
      %s30 = sadd.s32 %s29, 1
      %s31 = scalar_select %p28, %s29, %s30
      %p34 = pneg %p28
      %p35 = scmp.eq.s32.totalorder %s19, 1
      %p36 = por %p34, %p35
      %p37 = scmp.ne.s32.totalorder %s29, %s32
      %p38 = scmp.eq.s32.totalorder %s19, 0
      %p39 = por %p37, %p38
      %p40 = scmp.ne.s32.totalorder %s29, %s32
      %p41 = scmp.eq.s32.totalorder %s24, 1
      %p42 = por %p40, %p41
      %p43 = scmp.ne.s32.totalorder %s32, %s33
      %p44 = scmp.eq.s32.totalorder %s24, 0
      %p45 = por %p43, %p44
      %p46 = scmp.ne.s32.totalorder %s32, %s33
      %p47 = scmp.eq.s32.totalorder %s25, 1
      %p48 = por %p46, %p47
      %p50 = scmp.ne.s32.totalorder %s33, %s49
      %p51 = scmp.eq.s32.totalorder %s25, 0
      %p52 = por %p50, %p51
      %s54 = sadd.s32 %s53, 1
      %p57 = scmp.eq.s32.totalorder %s19, 1
      %p58 = scmp.ne.s32.totalorder %s53, %s55
      %p59 = scmp.eq.s32.totalorder %s19, 0
      %p60 = por %p58, %p59
      %p61 = scmp.ne.s32.totalorder %s53, %s55
      %p62 = scmp.eq.s32.totalorder %s24, 1
      %p63 = por %p61, %p62
      %p64 = scmp.ne.s32.totalorder %s55, %s56
      %p65 = scmp.eq.s32.totalorder %s24, 0
      %p66 = por %p64, %p65
      %p67 = scmp.ne.s32.totalorder %s55, %s56
      %p68 = scmp.eq.s32.totalorder %s25, 1
      %p69 = por %p67, %p68
      %p71 = scmp.ne.s32.totalorder %s56, %s70
      %p72 = scmp.eq.s32.totalorder %s25, 0
      %p73 = por %p71, %p72
      %s75 = sadd.s32 %s74, 1
      %p78 = scmp.eq.s32.totalorder %s19, 1
      %p79 = scmp.ne.s32.totalorder %s74, %s76
      %p80 = scmp.eq.s32.totalorder %s19, 0
      %p81 = por %p79, %p80
      %p82 = scmp.ne.s32.totalorder %s74, %s76
      %p83 = scmp.eq.s32.totalorder %s24, 1
      %p84 = por %p82, %p83
      %p85 = scmp.ne.s32.totalorder %s76, %s77
      %p86 = scmp.eq.s32.totalorder %s24, 0
      %p87 = por %p85, %p86
      %p88 = scmp.ne.s32.totalorder %s76, %s77
      %p89 = scmp.eq.s32.totalorder %s25, 1
      %p90 = por %p88, %p89
      %p92 = scmp.ne.s32.totalorder %s77, %s91
      %p93 = scmp.eq.s32.totalorder %s25, 0
      %p94 = por %p92, %p93
      %s95 = ssub.s32 %s19, %s26
      %p96 = scmp.eq.s32.totalorder %s95, 0
      %s98 = sadd.s32 %s97, 1
      %s99 = scalar_select %p96, %s97, %s98
      %p102 = pneg %p96
      %p103 = scmp.eq.s32.totalorder %s19, 1
      %p104 = por %p102, %p103
      %p105 = scmp.ne.s32.totalorder %s97, %s100
      %p106 = scmp.eq.s32.totalorder %s19, 0
      %p107 = por %p105, %p106
      %p108 = scmp.ne.s32.totalorder %s97, %s100
      %p109 = scmp.eq.s32.totalorder %s24, 1
      %p110 = por %p108, %p109
      %p111 = scmp.ne.s32.totalorder %s100, %s101
      %p112 = scmp.eq.s32.totalorder %s24, 0
      %p113 = por %p111, %p112
      %p114 = scmp.ne.s32.totalorder %s100, %s101
      %p115 = scmp.eq.s32.totalorder %s25, 1
      %p116 = por %p114, %p115
      %p118 = scmp.ne.s32.totalorder %s101, %s117
      %p119 = scmp.eq.s32.totalorder %s25, 0
      %p120 = por %p118, %p119
      %p121 = scmp.le.s32.totalorder 1, %s19
      %p122 = scmp.lt.s32.totalorder %s19, 3
      %p123 = pnand %p121, %p122
      %p124 = pneg %p123
      // Predicated region
      $region9: #{tpu_custom_call.1} parent=5 // pred_check
        _
      $region10: #{tpu_custom_call.1} parent=5 // pred_check_branch
        %126 = sbr.rel (%p123) target = $region12
      $region11: #{tpu_custom_call.1} parent=5 // pred_region
        %s127 = ssub.s32 %s19, 1
        // Predicated region
        $region13: #{tpu_custom_call.1} parent=11 // pred_check
          %p128 = pneg %p66
        $region14: #{tpu_custom_call.1} parent=11 // pred_check_branch
          %130 = sbr.rel (%p128) target = $region16
        $region15: #{tpu_custom_call.1} parent=11 // pred_region
          _
        $region16: #{tpu_custom_call.1} parent=11 // pred_fallthru
          _
        // Predicated region
        $region17: #{tpu_custom_call.1} parent=11 // pred_check
          %p131 = pneg %p87
        $region18: #{tpu_custom_call.1} parent=11 // pred_check_branch
          %133 = sbr.rel (%p131) target = $region20
        $region19: #{tpu_custom_call.1} parent=11 // pred_region
          _
        $region20: #{tpu_custom_call.1} parent=11 // pred_fallthru
          _
      $region12: #{tpu_custom_call.1} parent=5 // pred_fallthru
        _
      %p134 = scmp.lt.s32.totalorder %s19, 2
      // Predicated region
      $region21: #{tpu_custom_call.1} parent=5 // pred_check
        %p135 = pneg %p134
      $region22: #{tpu_custom_call.1} parent=5 // pred_check_branch
        %137 = sbr.rel (%p135) target = $region24
      $region23: #{tpu_custom_call.1} parent=5 // pred_region
        // Predicated region
        $region25: #{tpu_custom_call.1} parent=23 // pred_check
          %p138 = pneg %p39
        $region26: #{tpu_custom_call.1} parent=23 // pred_check_branch
          %140 = sbr.rel (%p138) target = $region28
        $region27: #{tpu_custom_call.1} parent=23 // pred_region
          %s141 = sand.u32 %s29, 1
          %s142 = scalar_lea.sflag [#allocation5], %s141
          %s143 = sand.u32 %s29, 1
          %s144 = smul.addr %s143, 16
          %s145 = scalar_lea.vmem [#allocation4], %s144
          %s147 = ssub.s32 256, 256
          %148 = vsyncadd %s142, %s147
          %s149 = smul.addr %s19, 2
          %s150 = smul.addr %s149, 128
          %s151 = scalar_lea.hbm %s0, %s150
          %s153 = sshll.u32 %s145, 4
          %s154 = int_to_ptr.vmem [resolvable:$true] %s153
          %156 = dma.hbm_to_vmem [thread:$0]  %s151, 256, %s154, %s142
        $region28: #{tpu_custom_call.1} parent=23 // pred_fallthru
          _
      $region24: #{tpu_custom_call.1} parent=5 // pred_fallthru
        _
      %p157 = scmp.le.s32.totalorder 1, %s19
      %p158 = scmp.lt.s32.totalorder %s19, 3
      %p159 = pnand %p157, %p158
      %p160 = pneg %p159
      // Predicated region
      $region29: #{tpu_custom_call.1} parent=5 // pred_check
        _
      $region30: #{tpu_custom_call.1} parent=5 // pred_check_branch
        %162 = sbr.rel (%p159) target = $region32
      $region31: #{tpu_custom_call.1} parent=5 // pred_region
        %s163 = ssub.s32 %s19, 1
        %s164 = sand.u32 %s32, 1
        %s165 = scalar_lea.sflag [#allocation5], %s164
        %s166 = sand.u32 %s32, 1
        %s167 = smul.addr %s166, 16
        %s168 = scalar_lea.vmem [#allocation4], %s167
        // Predicated region
        $region33: #{tpu_custom_call.1} parent=31 // pred_check
          %p169 = pneg %p45
        $region34: #{tpu_custom_call.1} parent=31 // pred_check_branch
          %171 = sbr.rel (%p169) target = $region36
        $region35: #{tpu_custom_call.1} parent=31 // pred_region
          %172 = dma.done %s165, 256
        $region36: #{tpu_custom_call.1} parent=31 // pred_fallthru
          _
        %s173 = sand.u32 %s32, 1
        %s174 = scalar_lea.sflag [#allocation5], %s173
        %s175 = sand.u32 %s32, 1
        %s176 = smul.addr %s175, 16
        %s177 = scalar_lea.vmem [#allocation4], %s176
        %p178 = pneg %p45
        %p179 = pneg %p42
        %p180 = pneg %p66
        %p181 = pneg %p63
        %p182 = pneg %p87
        %p183 = pneg %p84
        %p184 = pneg %p113
        %p185 = pneg %p110
        %s186 = sand.u32 %s100, 1
        %s187 = scalar_lea.sflag [#allocation6], %s186
        %s188 = sand.u32 %s100, 1
        %s189 = smul.addr %s188, 16
        %s190 = scalar_lea.vmem [#allocation7], %s189
        %v191 = vld [vmem:[%s168] sm:$0xff]
        %v192 = vld [vmem:[%s168 + $0x8] sm:$0xff]
        %v193 = vadd.f32 %v191, %v192
        %194 = vadd.xlane.f32.xlu0 %v193
        %v195 = vpop.xlane.xlu0 %194
        %v196 = vmul.f32 %v195, 0.00390625
        %v197 = vsub.f32 %v191, %v196
        %v198 = vsub.f32 %v192, %v196
        %v199 = vmul.f32 %v197, %v197
        %v200 = vmul.f32 %v198, %v198
        %v201 = vadd.f32 %v199, %v200
        %202 = vadd.xlane.f32.xlu0 %v201
        %v203 = vpop.xlane.xlu0 %202
        %v204 = vmul.f32 %v203, 0.003921569
        %v205 = vrsqrt.pop %v204
        %v206 = vmul.f32 %v204, %v205
        %vm207 = vcmp.eq.f32.partialorder %v204, inf
        %v208 = vsel %vm207, %v204, %v206
        %vm209 = vcmp.eq.f32.partialorder %v204, 0.0
        %v210 = vand.u32 %v204, 2147483648
        %v211 = vsel %vm209, %v210, %v208
        %v212 = vld [vmem:[#allocation2] sm:$0x1]
        %s213 = vtos %v212
        %v214 = vld [vmem:[#allocation3] sm:$0x1]
        %s215 = vtos %v214
        %v216 = vadd.f32 %v211, 1e-06
        %v217 = vstv %s213
        %v218 = vrcp.pop %v216
        %v219 = vmul.f32 %v217, %v218
        %v220 = vmul.f32 %v197, %v219
        %v221 = vmul.f32 %v198, %v219
        %v222 = vstv %s215
        %v223 = vadd.f32 %v220, %v222
        %v224 = vadd.f32 %v221, %v222
        %225 = vst [vmem:[%s190] sm:$0xff] %v223
        %226 = vst [vmem:[%s190 + $0x8] sm:$0xff] %v224
        %s227 = sand.u32 %s100, 1
        %s228 = scalar_lea.sflag [#allocation6], %s227
        %s229 = sand.u32 %s100, 1
        %s230 = smul.addr %s229, 16
        %s231 = scalar_lea.vmem [#allocation7], %s230
        // Predicated region
        $region37: #{tpu_custom_call.1} parent=31 // pred_check
          %p232 = pneg %p110
        $region38: #{tpu_custom_call.1} parent=31 // pred_check_branch
          %234 = sbr.rel (%p232) target = $region40
        $region39: #{tpu_custom_call.1} parent=31 // pred_region
          %s236 = ssub.s32 256, 256
          %237 = vsyncadd %s228, %s236
          %s238 = smul.addr %s24, 2
          %s239 = smul.addr %s238, 128
          %s240 = scalar_lea.hbm %s3, %s239
          %s242 = sshll.u32 %s231, 4
          %s243 = int_to_ptr.vmem [resolvable:$true] %s242
          %245 = dma.vmem_to_hbm [thread:$0]  %s243, 256, %s240, %s228
        $region40: #{tpu_custom_call.1} parent=31 // pred_fallthru
          _
      $region32: #{tpu_custom_call.1} parent=5 // pred_fallthru
        _
      %p246 = scmp.le.s32.totalorder 2, %s19
      // Predicated region
      $region41: #{tpu_custom_call.1} parent=5 // pred_check
        %p247 = pneg %p246
      $region42: #{tpu_custom_call.1} parent=5 // pred_check_branch
        %249 = sbr.rel (%p247) target = $region44
      $region43: #{tpu_custom_call.1} parent=5 // pred_region
        %s250 = ssub.s32 %s19, 2
        // Predicated region
        $region45: #{tpu_custom_call.1} parent=43 // pred_check
          %p251 = pneg %p116
        $region46: #{tpu_custom_call.1} parent=43 // pred_check_branch
          %253 = sbr.rel (%p251) target = $region48
        $region47: #{tpu_custom_call.1} parent=43 // pred_region
          %s254 = sand.u32 %s101, 1
          %s255 = scalar_lea.sflag [#allocation6], %s254
          %s256 = sand.u32 %s101, 1
          %s257 = smul.addr %s256, 16
          %s258 = scalar_lea.vmem [#allocation7], %s257
          %259 = dma.done %s255, 256
        $region48: #{tpu_custom_call.1} parent=43 // pred_fallthru
          _
      $region44: #{tpu_custom_call.1} parent=5 // pred_fallthru
        _
    $region6: #{tpu_custom_call.1} parent=1 // loop_footer
      %s23 = sadd.s32 1, %s19
    $region7: #{tpu_custom_call.1} parent=1 // loop_footer_branch
      %18 = sbr.rel target = $region3
    $region8: #{tpu_custom_call.1} parent=1 // loop_exit
      _
    %260 = vsyncpa [#allocation5], 1
    %s261 = scalar_lea.sflag [#allocation5], 1
    %262 = vsyncpa %s261, 1
    %263 = vsyncpa [#allocation6], 1
    %s264 = scalar_lea.sflag [#allocation6], 1
    %265 = vsyncpa %s264, 1

</llo_original>
